<compile_context>
chip_gen: v5e
topology: v5e:2x2
jax: 0.10.0
libtpu: 0.0.40
codegen_flags: <defaults>
</compile_context>

<pallas_src>
import functools

import jax
import jax.numpy as jnp
from jax import lax
from jax.experimental import pallas as pl
from jax.experimental.pallas import tpu as pltpu


def _attention_kernel(q_ref, k_ref, wq_ref, mask_ref, o_ref, *, add_activation):
    # Block views:
    #   q_ref:    (1, Nq,  D)   full query for this batch element
    #   k_ref:    (1, Tnk, D)   tile of keys
    #   wq_ref:   (D, D)        raw torch nn.Linear weight (out, in)
    #   mask_ref: (1, Tnk, Nq)
    #   o_ref:    (1, Tnk, Nq)
    key = k_ref[0]                        # (Tnk, D)
    query = q_ref[0]                      # (Nq, D)
    wq = wq_ref[...]                      # (D, D)

    # score = key @ Wq @ query^T  ==  key @ (query @ Wq^T)^T  ==  key @ q(query)^T
    kq = jnp.dot(key, wq, preferred_element_type=jnp.float32)            # (Tnk, D)
    score = lax.dot_general(kq, query, (((1,), (1,)), ((), ())),
                            preferred_element_type=jnp.float32)          # (Tnk, Nq)

    if add_activation:                                                    # F.leaky_relu
        score = jnp.where(score >= 0.0, score, jnp.float32(0.01) * score)

    score = jax.nn.sigmoid(score) * mask_ref[0].astype(jnp.float32)
    o_ref[0] = score.astype(o_ref.dtype)


def attention_forward(query, key, mask, wq, *, add_activation):
    """Pallas equivalent of Attention.forward.

    query: (B, Nq, D) f32
    key:   (B, Nk, D) f32
    mask:  (B, Nk, Nq) f32
    wq:    (D, D) f32  -- torch nn.Linear(input_dim, input_dim, bias=False).weight
    """
    B, Nq, D = query.shape
    _, Nk, _ = key.shape
    assert key.shape == (B, Nk, D) and mask.shape == (B, Nk, Nq)

    # Tile along Nk so big problems pipeline through VMEM; fall back to one
    # full-extent block when Nk is small / indivisible.
    block_nk = Nk
    for cand in (512, 256, 128):
        if Nk % cand == 0:
            block_nk = cand
            break

    grid = (B, Nk // block_nk)
    kernel = functools.partial(_attention_kernel, add_activation=add_activation)

    return pl.pallas_call(
        kernel,
        out_shape=jax.ShapeDtypeStruct((B, Nk, Nq), jnp.float32),
        grid_spec=pltpu.PrefetchScalarGridSpec(
            num_scalar_prefetch=0,
            grid=grid,
            in_specs=[
                pl.BlockSpec((1, Nq, D), lambda b, n: (b, 0, 0)),         # query
                pl.BlockSpec((1, block_nk, D), lambda b, n: (b, n, 0)),   # key
                pl.BlockSpec((D, D), lambda b, n: (0, 0)),                # Wq
                pl.BlockSpec((1, block_nk, Nq), lambda b, n: (b, n, 0)),  # mask
            ],
            out_specs=pl.BlockSpec((1, block_nk, Nq), lambda b, n: (b, n, 0)),
        ),
        compiler_params=pltpu.CompilerParams(
            dimension_semantics=("parallel", "parallel")),
    )(query, key, wq, mask)


def _attention_ref(query, key, mask, wq, add_activation):
    """Pure-JAX reference mirroring the PyTorch module."""
    qp = jnp.einsum("bqe,de->bqd", query, wq)            # nn.Linear, no bias
    score = jnp.einsum("bnd,bqd->bnq", key, qp)          # key @ q(query)^T
    if add_activation:
        score = jnp.where(score >= 0.0, score, 0.01 * score)
    return jax.nn.sigmoid(score) * mask


if __name__ == "__main__":
    B, Nq, Nk, D = 2, 8, 8, 32
    root = jax.random.PRNGKey(0)
    kq, kk, km, kw = jax.random.split(root, 4)

    query = jax.random.normal(kq, (B, Nq, D), jnp.float32)
    key = jax.random.normal(kk, (B, Nk, D), jnp.float32)
    mask = (jax.random.uniform(km, (B, Nk, Nq)) > 0.3).astype(jnp.float32)
    wq = 0.1 * jax.random.normal(kw, (D, D), jnp.float32)

    ok = True
    for add_activation in (True, False):
        out = attention_forward(query, key, mask, wq, add_activation=add_activation)
        jax.block_until_ready(out)
        assert out.shape == (B, Nk, Nq) and out.dtype == jnp.float32
        ref = _attention_ref(query, key, mask, wq, add_activation)
        ok = ok and bool(jnp.allclose(out, ref, rtol=1e-5, atol=1e-5))

    if ok:
        print("KERNEL_OK")
</pallas_src>

<mosaic_0001>
module attributes {stable_mosaic.version = 11 : i64} {
  func.func @_attention_kernel(%arg0: i32, %arg1: i32, %arg2: memref<1x8x32xf32, #tpu.memory_space<vmem>>, %arg3: memref<1x8x32xf32, #tpu.memory_space<vmem>>, %arg4: memref<32x32xf32, #tpu.memory_space<vmem>>, %arg5: memref<1x8x8xf32, #tpu.memory_space<vmem>>, %arg6: memref<1x8x8xf32, #tpu.memory_space<vmem>>) attributes {dimension_semantics = [#tpu.dimension_semantics<parallel>, #tpu.dimension_semantics<parallel>], iteration_bounds = array<i64: 2, 1>, scalar_prefetch = 0 : i64, scratch_operands = 0 : i64, tpu.core_type = #tpu.core_type<tc>, window_params = [{transform_indices = @transform_0, window_bounds = array<i64: 1, 8, 32>}, {transform_indices = @transform_1, window_bounds = array<i64: 1, 8, 32>}, {pipeline_mode = #tpu.pipeline_mode<synchronous>, transform_indices = @transform_2, window_bounds = array<i64: 32, 32>}, {transform_indices = @transform_3, window_bounds = array<i64: 1, 8, 8>}, {transform_indices = @transform_4, window_bounds = array<i64: 1, 8, 8>}]} {
    %c0 = arith.constant 0 : index
    %c0_0 = arith.constant 0 : index
    %c0_1 = arith.constant 0 : index
    %0 = vector.load %arg3[%c0, %c0_0, %c0_1] : memref<1x8x32xf32, #tpu.memory_space<vmem>>, vector<1x8x32xf32>
    %1 = vector.shape_cast %0 : vector<1x8x32xf32> to vector<8x32xf32>
    %c0_2 = arith.constant 0 : index
    %c0_3 = arith.constant 0 : index
    %c0_4 = arith.constant 0 : index
    %2 = vector.load %arg2[%c0_2, %c0_3, %c0_4] : memref<1x8x32xf32, #tpu.memory_space<vmem>>, vector<1x8x32xf32>
    %3 = vector.shape_cast %2 : vector<1x8x32xf32> to vector<8x32xf32>
    %c0_5 = arith.constant 0 : index
    %c0_6 = arith.constant 0 : index
    %4 = vector.load %arg4[%c0_5, %c0_6] : memref<32x32xf32, #tpu.memory_space<vmem>>, vector<32x32xf32>
    %cst = arith.constant dense<0.000000e+00> : vector<8x32xf32>
    %5 = tpu.matmul %1, %4, %cst {dimension_numbers = #tpu.dot_dimension_numbers<[1], [0], [0], [1], [0, 0, 1, 1], [], []>} : vector<8x32xf32>, vector<32x32xf32>, vector<8x32xf32> -> vector<8x32xf32>
    %cst_7 = arith.constant dense<0.000000e+00> : vector<8x8xf32>
    %6 = tpu.matmul %5, %3, %cst_7 {dimension_numbers = #tpu.dot_dimension_numbers<[1], [1], [0], [0], [0, 0, 1, 0], [], []>} : vector<8x32xf32>, vector<8x32xf32>, vector<8x8xf32> -> vector<8x8xf32>
    %cst_8 = arith.constant 0.000000e+00 : f32
    %7 = vector.broadcast %cst_8 : f32 to vector<8x8xf32>
    %8 = arith.cmpf oge, %6, %7 : vector<8x8xf32>
    %cst_9 = arith.constant 0.00999999977 : f32
    %9 = vector.broadcast %cst_9 : f32 to vector<8x8xf32>
    %10 = arith.mulf %9, %6 : vector<8x8xf32>
    %11 = arith.select %8, %6, %10 : vector<8x8xi1>, vector<8x8xf32>
    %12 = arith.negf %11 : vector<8x8xf32>
    %13 = math.exp %12 : vector<8x8xf32>
    %cst_10 = arith.constant 1.000000e+00 : f32
    %14 = vector.broadcast %cst_10 : f32 to vector<8x8xf32>
    %15 = arith.addf %14, %13 : vector<8x8xf32>
    %16 = arith.divf %14, %15 : vector<8x8xf32>
    %c0_11 = arith.constant 0 : index
    %c0_12 = arith.constant 0 : index
    %c0_13 = arith.constant 0 : index
    %17 = vector.load %arg5[%c0_11, %c0_12, %c0_13] : memref<1x8x8xf32, #tpu.memory_space<vmem>>, vector<1x8x8xf32>
    %18 = vector.shape_cast %17 : vector<1x8x8xf32> to vector<8x8xf32>
    %19 = arith.mulf %16, %18 : vector<8x8xf32>
    %c0_14 = arith.constant 0 : index
    %c0_15 = arith.constant 0 : index
    %c0_16 = arith.constant 0 : index
    %20 = vector.load %arg6[%c0_14, %c0_15, %c0_16] : memref<1x8x8xf32, #tpu.memory_space<vmem>>, vector<1x8x8xf32>
    %21 = vector.shape_cast %20 : vector<1x8x8xf32> to vector<8x8xf32>
    %22 = vector.shape_cast %19 : vector<8x8xf32> to vector<1x8x8xf32>
    tpu.vector_store %arg6[%c0_14, %c0_15, %c0_16], %22 {strides = array<i32>} : memref<1x8x8xf32, #tpu.memory_space<vmem>>, vector<1x8x8xf32>,
    return
  }
  func.func @transform_0(%arg0: i32, %arg1: i32) -> (i32, i32, i32) {
    %c0_i32 = arith.constant 0 : i32
    %c0_i32_0 = arith.constant 0 : i32
    %c0_i32_1 = arith.constant 0 : i32
    return %arg0, %c0_i32, %c0_i32_0 : i32, i32, i32
  }
  func.func @transform_1(%arg0: i32, %arg1: i32) -> (i32, i32, i32) {
    %c0_i32 = arith.constant 0 : i32
    %c0_i32_0 = arith.constant 0 : i32
    return %arg0, %arg1, %c0_i32 : i32, i32, i32
  }
  func.func @transform_2(%arg0: i32, %arg1: i32) -> (i32, i32) {
    %c0_i32 = arith.constant 0 : i32
    %c0_i32_0 = arith.constant 0 : i32
    %c0_i32_1 = arith.constant 0 : i32
    return %c0_i32, %c0_i32_0 : i32, i32
  }
  func.func @transform_3(%arg0: i32, %arg1: i32) -> (i32, i32, i32) {
    %c0_i32 = arith.constant 0 : i32
    %c0_i32_0 = arith.constant 0 : i32
    return %arg0, %arg1, %c0_i32 : i32, i32, i32
  }
  func.func @transform_4(%arg0: i32, %arg1: i32) -> (i32, i32, i32) {
    %c0_i32 = arith.constant 0 : i32
    %c0_i32_0 = arith.constant 0 : i32
    return %arg0, %arg1, %c0_i32 : i32, i32, i32
  }
}

</mosaic_0001>

<llo_original>
// kernel: tpu_custom_call.1
$region0: #{tpu_custom_call.1}
  #allocation0 [shape = 'u32[]', space=smem, size = 0x4, offset = 0x4, fixed_abs, tag = 'smem constant byte address 0x4 - core index']
  #allocation1 [shape = 'u32[72,128]{1,0:T(1,128)}', space=vmem, size = 0x9000, scoped, tag = 'internal scratch']
  %s0 = inlined_call_operand.hbm [shape: f32[2,8,32], index: 0, kind: input, shape index: {}]
  %s1 = inlined_call_operand.hbm [shape: f32[2,8,32], index: 1, kind: input, shape index: {}]
  %s2 = inlined_call_operand.hbm [shape: f32[32,32], index: 2, kind: input, shape index: {}]
  %s3 = inlined_call_operand.hbm [shape: f32[2,8,8], index: 3, kind: input, shape index: {}]
  %s4 = inlined_call_operand.hbm [shape: f32[2,8,8], index: 4, kind: output, shape index: {}]
  %s5 = sld [smem:[#allocation0]]
  $region65: #{tpu_custom_call.1} parent=0
    _
  %s7 = ssub.s32 1, %s5
  %s8 = scalar_select 0, %s7, %s5
  $region1: #{tpu_custom_call.1} parent=0
    #allocation2 [shape = 'u8[8192]{0}', space=vmem, size = 0x2000, scoped, tag = 'input window, operand 0']
    #allocation3 [shape = 's32[2]{0}', space=sflag, size = 0x8, scoped, tag = 'scoped memory for tpu_custom_call.1']
    #allocation4 [shape = 's32[2]{0}', space=sflag, size = 0x8, scoped, tag = 'scoped memory for tpu_custom_call.1']
    #allocation5 [shape = 'u8[8192]{0}', space=vmem, size = 0x2000, scoped, tag = 'input window, operand 1']
    #allocation6 [shape = 's32[2]{0}', space=sflag, size = 0x8, scoped, tag = 'scoped memory for tpu_custom_call.1']
    #allocation7 [shape = 'u8[16384]{0}', space=vmem, size = 0x4000, scoped, tag = 'input window, operand 2, single buffered']
    #allocation8 [shape = 'u8[8192]{0}', space=vmem, size = 0x2000, scoped, tag = 'input window, operand 3']
    #allocation9 [shape = 's32[2]{0}', space=sflag, size = 0x8, scoped, tag = 'scoped memory for tpu_custom_call.1']
    #allocation10 [shape = 'u8[8192]{0}', space=vmem, size = 0x2000, scoped, tag = 'output window, operand 0']
    %9 = vsyncpa [#allocation3], 0
    %s10 = scalar_lea.sflag [#allocation3], 1
    %11 = vsyncpa %s10, 0
    %12 = vsyncpa [#allocation6], 0
    %s13 = scalar_lea.sflag [#allocation6], 1
    %14 = vsyncpa %s13, 0
    %15 = vsyncpa [#allocation9], 0
    %s16 = scalar_lea.sflag [#allocation9], 1
    %17 = vsyncpa %s16, 0
    %18 = vsyncpa [#allocation4], 0
    %s19 = scalar_lea.sflag [#allocation4], 1
    %20 = vsyncpa %s19, 0
    loop: start=0, step=1, limit=4
    $region2: #{tpu_custom_call.1} parent=1 // loop_pre_header
      _
    $region3: #{tpu_custom_call.1} parent=1 // loop_header
      %s22 = sphi 0, %s26
      %p23 = scmp.ge.s32.totalorder %s22, 4
      %s29 = sphi 0, %s41
      %s30 = sphi 0, %s37
      %s31 = sphi 0, %s29
      %s32 = sphi 0, %s30
      %s33 = sphi 0, %s31
      %s34 = sphi 0, %s32
      %s44 = sphi 0, %s46
      %s47 = sphi 0, %s44
      %s48 = sphi 0, %s47
      %s64 = sphi 0, %s48
      %s72 = sphi 0, %s74
      %s75 = sphi 0, %s72
      %s76 = sphi 0, %s75
      %s92 = sphi 0, %s76
      %s96 = sphi 0, %s96
      %s98 = sphi 0, %s96
      %s99 = sphi 0, %s98
      %s113 = sphi 0, %s99
      %s121 = sphi 0, %s123
      %s124 = sphi 0, %s121
      %s125 = sphi 0, %s124
      %s141 = sphi 0, %s125
      %s149 = sphi 0, %s151
      %s152 = sphi 0, %s149
      %s153 = sphi 0, %s152
      %s169 = sphi 0, %s153
    $region4: #{tpu_custom_call.1} parent=1 // loop_header_branch
      %25 = sbr.rel (%p23) target = $region8
    $region5: #{tpu_custom_call.1} parent=1 // loop_body
      %s27 = ssub.s32 %s22, 1
      %s28 = ssub.s32 %s22, 2
      %s35 = sadd.s32 1, %s30
      %p36 = scmp.ge.s32.totalorder %s35, 1
      %s37 = scalar_select %p36, 0, %s35
      %s38 = sadd.s32 1, %s29
      %s39 = scalar_select %p36, %s38, %s29
      %p40 = scmp.ge.s32.totalorder %s39, 2
      %s41 = scalar_select %p40, 0, %s39
      %s42 = ssub.s32 %s29, %s41
      %p43 = scmp.eq.s32.totalorder %s42, 0
      %s45 = sadd.s32 %s44, 1
      %s46 = scalar_select %p43, %s44, %s45
      %p49 = pneg %p43
      %p50 = scmp.eq.s32.totalorder %s22, 1
      %p51 = por %p49, %p50
      %p52 = scmp.ne.s32.totalorder %s44, %s47
      %p53 = scmp.eq.s32.totalorder %s22, 0
      %p54 = por %p52, %p53
      %p55 = scmp.ne.s32.totalorder %s44, %s47
      %p56 = scmp.eq.s32.totalorder %s27, 1
      %p57 = por %p55, %p56
      %p58 = scmp.ne.s32.totalorder %s47, %s48
      %p59 = scmp.eq.s32.totalorder %s27, 0
      %p60 = por %p58, %p59
      %p61 = scmp.ne.s32.totalorder %s47, %s48
      %p62 = scmp.eq.s32.totalorder %s28, 1
      %p63 = por %p61, %p62
      %p65 = scmp.ne.s32.totalorder %s48, %s64
      %p66 = scmp.eq.s32.totalorder %s28, 0
      %p67 = por %p65, %p66
      %s68 = ssub.s32 %s29, %s41
      %s69 = ssub.s32 %s30, %s37
      %s70 = sor.u32 %s68, %s69
      %p71 = scmp.eq.s32.totalorder %s70, 0
      %s73 = sadd.s32 %s72, 1
      %s74 = scalar_select %p71, %s72, %s73
      %p77 = pneg %p71
      %p78 = scmp.eq.s32.totalorder %s22, 1
      %p79 = por %p77, %p78
      %p80 = scmp.ne.s32.totalorder %s72, %s75
      %p81 = scmp.eq.s32.totalorder %s22, 0
      %p82 = por %p80, %p81
      %p83 = scmp.ne.s32.totalorder %s72, %s75
      %p84 = scmp.eq.s32.totalorder %s27, 1
      %p85 = por %p83, %p84
      %p86 = scmp.ne.s32.totalorder %s75, %s76
      %p87 = scmp.eq.s32.totalorder %s27, 0
      %p88 = por %p86, %p87
      %p89 = scmp.ne.s32.totalorder %s75, %s76
      %p90 = scmp.eq.s32.totalorder %s28, 1
      %p91 = por %p89, %p90
      %p93 = scmp.ne.s32.totalorder %s76, %s92
      %p94 = scmp.eq.s32.totalorder %s28, 0
      %p95 = por %p93, %p94
      %s97 = sadd.s32 %s96, 1
      %p100 = scmp.eq.s32.totalorder %s22, 1
      %p101 = scmp.ne.s32.totalorder %s96, %s98
      %p102 = scmp.eq.s32.totalorder %s22, 0
      %p103 = por %p101, %p102
      %p104 = scmp.ne.s32.totalorder %s96, %s98
      %p105 = scmp.eq.s32.totalorder %s27, 1
      %p106 = por %p104, %p105
      %p107 = scmp.ne.s32.totalorder %s98, %s99
      %p108 = scmp.eq.s32.totalorder %s27, 0
      %p109 = por %p107, %p108
      %p110 = scmp.ne.s32.totalorder %s98, %s99
      %p111 = scmp.eq.s32.totalorder %s28, 1
      %p112 = por %p110, %p111
      %p114 = scmp.ne.s32.totalorder %s99, %s113
      %p115 = scmp.eq.s32.totalorder %s28, 0
      %p116 = por %p114, %p115
      %s117 = ssub.s32 %s29, %s41
      %s118 = ssub.s32 %s30, %s37
      %s119 = sor.u32 %s117, %s118
      %p120 = scmp.eq.s32.totalorder %s119, 0
      %s122 = sadd.s32 %s121, 1
      %s123 = scalar_select %p120, %s121, %s122
      %p126 = pneg %p120
      %p127 = scmp.eq.s32.totalorder %s22, 1
      %p128 = por %p126, %p127
      %p129 = scmp.ne.s32.totalorder %s121, %s124
      %p130 = scmp.eq.s32.totalorder %s22, 0
      %p131 = por %p129, %p130
      %p132 = scmp.ne.s32.totalorder %s121, %s124
      %p133 = scmp.eq.s32.totalorder %s27, 1
      %p134 = por %p132, %p133
      %p135 = scmp.ne.s32.totalorder %s124, %s125
      %p136 = scmp.eq.s32.totalorder %s27, 0
      %p137 = por %p135, %p136
      %p138 = scmp.ne.s32.totalorder %s124, %s125
      %p139 = scmp.eq.s32.totalorder %s28, 1
      %p140 = por %p138, %p139
      %p142 = scmp.ne.s32.totalorder %s125, %s141
      %p143 = scmp.eq.s32.totalorder %s28, 0
      %p144 = por %p142, %p143
      %s145 = ssub.s32 %s29, %s41
      %s146 = ssub.s32 %s30, %s37
      %s147 = sor.u32 %s145, %s146
      %p148 = scmp.eq.s32.totalorder %s147, 0
      %s150 = sadd.s32 %s149, 1
      %s151 = scalar_select %p148, %s149, %s150
      %p154 = pneg %p148
      %p155 = scmp.eq.s32.totalorder %s22, 1
      %p156 = por %p154, %p155
      %p157 = scmp.ne.s32.totalorder %s149, %s152
      %p158 = scmp.eq.s32.totalorder %s22, 0
      %p159 = por %p157, %p158
      %p160 = scmp.ne.s32.totalorder %s149, %s152
      %p161 = scmp.eq.s32.totalorder %s27, 1
      %p162 = por %p160, %p161
      %p163 = scmp.ne.s32.totalorder %s152, %s153
      %p164 = scmp.eq.s32.totalorder %s27, 0
      %p165 = por %p163, %p164
      %p166 = scmp.ne.s32.totalorder %s152, %s153
      %p167 = scmp.eq.s32.totalorder %s28, 1
      %p168 = por %p166, %p167
      %p170 = scmp.ne.s32.totalorder %s153, %s169
      %p171 = scmp.eq.s32.totalorder %s28, 0
      %p172 = por %p170, %p171
      %p173 = scmp.le.s32.totalorder 1, %s22
      %p174 = scmp.lt.s32.totalorder %s22, 3
      %p175 = pnand %p173, %p174
      %p176 = pneg %p175
      // Predicated region
      $region9: #{tpu_custom_call.1} parent=5 // pred_check
        _
      $region10: #{tpu_custom_call.1} parent=5 // pred_check_branch
        %178 = sbr.rel (%p175) target = $region12
      $region11: #{tpu_custom_call.1} parent=5 // pred_region
        %s179 = ssub.s32 %s22, 1
        // Predicated region
        $region13: #{tpu_custom_call.1} parent=11 // pred_check
          %p180 = pneg %p109
        $region14: #{tpu_custom_call.1} parent=11 // pred_check_branch
          %182 = sbr.rel (%p180) target = $region16
        $region15: #{tpu_custom_call.1} parent=11 // pred_region
          %184 = vsyncadd [#allocation6], 0
          %s185 = sshll.u32 %s2, 4
          %s186 = int_to_ptr.hbm [resolvable:$true] %s185
          %s187 = sshll.u32 [#allocation7], 4
          %s188 = int_to_ptr.vmem [resolvable:$true] %s187
          %193 = dma.hbm_to_vmem [thread:$0]  %s186, 512, %s188, [#allocation6], 128, 128, 8
        $region16: #{tpu_custom_call.1} parent=11 // pred_fallthru
          _
      $region12: #{tpu_custom_call.1} parent=5 // pred_fallthru
        _
      %p194 = scmp.lt.s32.totalorder %s22, 2
      // Predicated region
      $region17: #{tpu_custom_call.1} parent=5 // pred_check
        %p195 = pneg %p194
      $region18: #{tpu_custom_call.1} parent=5 // pred_check_branch
        %197 = sbr.rel (%p195) target = $region20
      $region19: #{tpu_custom_call.1} parent=5 // pred_region
        // Predicated region
        $region21: #{tpu_custom_call.1} parent=19 // pred_check
          %p198 = pneg %p54
        $region22: #{tpu_custom_call.1} parent=19 // pred_check_branch
          %200 = sbr.rel (%p198) target = $region24
        $region23: #{tpu_custom_call.1} parent=19 // pred_region
          %s201 = sand.u32 %s44, 1
          %s202 = scalar_lea.sflag [#allocation3], %s201
          %s203 = sand.u32 %s44, 1
          %s204 = smul.addr %s203, 8
          %s205 = scalar_lea.vmem [#allocation2], %s204
          %207 = vsyncadd %s202, 0
          %s208 = smul.addr %s29, 8
          %s209 = scalar_lea.hbm %s0, %s208
          %s211 = sshll.u32 %s209, 4
          %s212 = int_to_ptr.hbm [resolvable:$true] %s211
          %s213 = sshll.u32 %s205, 4
          %s214 = int_to_ptr.vmem [resolvable:$true] %s213
          %216 = dma.hbm_to_vmem [thread:$0]  %s212, 128, %s214, %s202
        $region24: #{tpu_custom_call.1} parent=19 // pred_fallthru
          _
        // Predicated region
        $region25: #{tpu_custom_call.1} parent=19 // pred_check
          %p217 = pneg %p82
        $region26: #{tpu_custom_call.1} parent=19 // pred_check_branch
          %219 = sbr.rel (%p217) target = $region28
        $region27: #{tpu_custom_call.1} parent=19 // pred_region
          %s220 = sand.u32 %s22, 1
          %s221 = scalar_lea.sflag [#allocation6], %s220
          %s222 = sand.u32 %s72, 1
          %s223 = smul.addr %s222, 8
          %s224 = scalar_lea.vmem [#allocation5], %s223
          %226 = vsyncadd %s221, 0
          %s227 = sadd.s32 %s30, %s29
          %s228 = smul.addr %s227, 8
          %s229 = scalar_lea.hbm %s1, %s228
          %s231 = sshll.u32 %s229, 4
          %s232 = int_to_ptr.hbm [resolvable:$true] %s231
          %s233 = sshll.u32 %s224, 4
          %s234 = int_to_ptr.vmem [resolvable:$true] %s233
          %236 = dma.hbm_to_vmem [thread:$0]  %s232, 128, %s234, %s221
        $region28: #{tpu_custom_call.1} parent=19 // pred_fallthru
          _
        // Predicated region
        $region29: #{tpu_custom_call.1} parent=19 // pred_check
          %p237 = pneg %p131
        $region30: #{tpu_custom_call.1} parent=19 // pred_check_branch
          %239 = sbr.rel (%p237) target = $region32
        $region31: #{tpu_custom_call.1} parent=19 // pred_region
          %s240 = sand.u32 %s121, 1
          %s241 = scalar_lea.sflag [#allocation9], %s240
          %s242 = sand.u32 %s121, 1
          %s243 = smul.addr %s242, 8
          %s244 = scalar_lea.vmem [#allocation8], %s243
          %246 = vsyncadd %s241, 0
          %s247 = sadd.s32 %s30, %s29
          %s248 = smul.addr %s247, 8
          %s249 = scalar_lea.hbm %s3, %s248
          %s251 = sshll.u32 %s249, 4
          %s252 = int_to_ptr.hbm [resolvable:$true] %s251
          %s253 = sshll.u32 %s244, 4
          %s254 = int_to_ptr.vmem [resolvable:$true] %s253
          %256 = dma.hbm_to_vmem [thread:$0]  %s252, 128, %s254, %s241
        $region32: #{tpu_custom_call.1} parent=19 // pred_fallthru
          _
      $region20: #{tpu_custom_call.1} parent=5 // pred_fallthru
        _
      %p257 = scmp.le.s32.totalorder 1, %s22
      %p258 = scmp.lt.s32.totalorder %s22, 3
      %p259 = pnand %p257, %p258
      %p260 = pneg %p259
      // Predicated region
      $region33: #{tpu_custom_call.1} parent=5 // pred_check
        _
      $region34: #{tpu_custom_call.1} parent=5 // pred_check_branch
        %262 = sbr.rel (%p259) target = $region36
      $region35: #{tpu_custom_call.1} parent=5 // pred_region
        %s263 = ssub.s32 %s22, 1
        %s264 = sand.u32 %s47, 1
        %s265 = scalar_lea.sflag [#allocation3], %s264
        %s266 = sand.u32 %s47, 1
        %s267 = smul.addr %s266, 8
        %s268 = scalar_lea.vmem [#allocation2], %s267
        // Predicated region
        $region37: #{tpu_custom_call.1} parent=35 // pred_check
          %p269 = pneg %p60
        $region38: #{tpu_custom_call.1} parent=35 // pred_check_branch
          %271 = sbr.rel (%p269) target = $region40
        $region39: #{tpu_custom_call.1} parent=35 // pred_region
          %273 = dma.done %s265, 128
        $region40: #{tpu_custom_call.1} parent=35 // pred_fallthru
          _
        %s274 = sand.u32 %s27, 1
        %s275 = scalar_lea.sflag [#allocation6], %s274
        %s276 = sand.u32 %s75, 1
        %s277 = smul.addr %s276, 8
        %s278 = scalar_lea.vmem [#allocation5], %s277
        // Predicated region
        $region41: #{tpu_custom_call.1} parent=35 // pred_check
          %p279 = pneg %p88
        $region42: #{tpu_custom_call.1} parent=35 // pred_check_branch
          %281 = sbr.rel (%p279) target = $region44
        $region43: #{tpu_custom_call.1} parent=35 // pred_region
          %283 = dma.done %s275, 128
        $region44: #{tpu_custom_call.1} parent=35 // pred_fallthru
          _
        // Predicated region
        $region45: #{tpu_custom_call.1} parent=35 // pred_check
          %p284 = pneg %p109
        $region46: #{tpu_custom_call.1} parent=35 // pred_check_branch
          %286 = sbr.rel (%p284) target = $region48
        $region47: #{tpu_custom_call.1} parent=35 // pred_region
          %288 = dma.done [#allocation6], 512
        $region48: #{tpu_custom_call.1} parent=35 // pred_fallthru
          _
        %s289 = sand.u32 %s124, 1
        %s290 = scalar_lea.sflag [#allocation9], %s289
        %s291 = sand.u32 %s124, 1
        %s292 = smul.addr %s291, 8
        %s293 = scalar_lea.vmem [#allocation8], %s292
        // Predicated region
        $region49: #{tpu_custom_call.1} parent=35 // pred_check
          %p294 = pneg %p137
        $region50: #{tpu_custom_call.1} parent=35 // pred_check_branch
          %296 = sbr.rel (%p294) target = $region52
        $region51: #{tpu_custom_call.1} parent=35 // pred_region
          %298 = dma.done %s290, 128
        $region52: #{tpu_custom_call.1} parent=35 // pred_fallthru
          _
        %s299 = sand.u32 %s47, 1
        %s300 = scalar_lea.sflag [#allocation3], %s299
        %s301 = sand.u32 %s47, 1
        %s302 = smul.addr %s301, 8
        %s303 = scalar_lea.vmem [#allocation2], %s302
        %p304 = pneg %p60
        %p305 = pneg %p57
        %s306 = sand.u32 %s27, 1
        %s307 = scalar_lea.sflag [#allocation6], %s306
        %s308 = sand.u32 %s75, 1
        %s309 = smul.addr %s308, 8
        %s310 = scalar_lea.vmem [#allocation5], %s309
        %p311 = pneg %p88
        %p312 = pneg %p85
        %p313 = pneg %p109
        %p314 = pneg %p106
        %s315 = sand.u32 %s124, 1
        %s316 = scalar_lea.sflag [#allocation9], %s315
        %s317 = sand.u32 %s124, 1
        %s318 = smul.addr %s317, 8
        %s319 = scalar_lea.vmem [#allocation8], %s318
        %p320 = pneg %p137
        %p321 = pneg %p134
        %p322 = pneg %p165
        %p323 = pneg %p162
        %s324 = sand.u32 %s152, 1
        %s325 = scalar_lea.sflag [#allocation4], %s324
        %s326 = sand.u32 %s152, 1
        %s327 = smul.addr %s326, 8
        %s328 = scalar_lea.vmem [#allocation10], %s327
        %v329 = vld [vmem:[%s278] sm:$0xff]
        %v330 = vld [vmem:[%s268] sm:$0xff]
        %v331 = vld [vmem:[#allocation7] sm:$0xff]
        %v332 = vld [vmem:[#allocation7 + $0x8] sm:$0xff]
        %v333 = vld [vmem:[#allocation7 + $0x10] sm:$0xff]
        %v334 = vld [vmem:[#allocation7 + $0x18] sm:$0xff]
        %vm335 = vcmask 261120
        %v337 = vsel %vm335, %v329, 0
        %339 = vmatpush.msra.mxu0 0.0
        %340 = vmatpush.msra.mxu0 0.0
        %341 = vmatpush.msra.mxu0 0.0
        %342 = vmatpush.msra.mxu0 0.0
        %343 = vmatpush.msra.mxu0 0.0
        %344 = vmatpush.msra.mxu0 0.0
        %345 = vmatpush.msra.mxu0 0.0
        %346 = vmatpush.msra.mxu0 0.0
        %347 = vmatpush.msra.mxu0 0.0
        %348 = vmatpush.msra.mxu0 0.0
        %349 = vmatpush.msra.mxu0 0.0
        %350 = vmatpush.msra.mxu0 0.0
        %351 = vmatpush.msra.mxu0 %v334
        %352 = vmatpush.msra.mxu0 %v333
        %353 = vmatpush.msra.mxu0 %v332
        %354 = vmatpush.msra.mxu0 %v331
        %355 = vmatmul.f32.gmra.mxu0 %v337
        %v356 = vpop.f32.mrf.mxu0
        %v357 = vadd.f32 0.0, %v356
        %358 = vdwg.mxu0
        %v360 = vsel %vm335, %v357, 0
        %v363 = vsel %vm335, %v330, 0
        %365 = vmatpush.xpose.msra.mxu0 0.0
        %366 = vmatpush.xpose.msra.mxu0 0.0
        %367 = vmatpush.xpose.msra.mxu0 0.0
        %368 = vmatpush.xpose.msra.mxu0 0.0
        %369 = vmatpush.xpose.msra.mxu0 0.0
        %370 = vmatpush.xpose.msra.mxu0 0.0
        %371 = vmatpush.xpose.msra.mxu0 0.0
        %372 = vmatpush.xpose.msra.mxu0 0.0
        %373 = vmatpush.xpose.msra.mxu0 0.0
        %374 = vmatpush.xpose.msra.mxu0 0.0
        %375 = vmatpush.xpose.msra.mxu0 0.0
        %376 = vmatpush.xpose.msra.mxu0 0.0
        %377 = vmatpush.xpose.msra.mxu0 0.0
        %378 = vmatpush.xpose.msra.mxu0 0.0
        %379 = vmatpush.xpose.msra.mxu0 0.0
        %380 = vmatpush.xpose.msra.mxu0 %v363
        %381 = vmatmul.f32.gmra.mxu0 %v360
        %v382 = vpop.f32.mrf.mxu0
        %v383 = vadd.f32 0.0, %v382
        %384 = vdwg.mxu0
        %vm385 = vcmp.ge.f32.partialorder %v383, 0.0
        %v386 = vmul.f32 %v383, 0.01
        %v387 = vsel %vm385, %v383, %v386
        %v388 = vxor.u32 %v387, 2147483648
        %v389 = vmul.f32 %v388, 1.442695
        %v390 = vpow.pop %v389
        %v391 = vadd.f32 %v390, 1.0
        %v392 = vrcp.pop %v391
        %v393 = vmul.f32 %v391, %v392
        %v394 = vsub.f32 1.0, %v393
        %v395 = vmul.f32 %v392, %v394
        %v396 = vadd.f32 %v392, %v395
        %vm397 = vweird.f32 %v391
        %vm398 = vweird.f32 %v392
        %vm399 = vmor %vm397, %vm398
        %v400 = vsel %vm399, %v392, %v396
        %v401 = vand.u32 2147483647, %v391
        %vm402 = vcmp.eq.f32.partialorder %v401, 8.507059e+37
        %v403 = vand.u32 %v391, 2147483648
        %v404 = vor.u32 1.1754944e-38, %v403
        %v405 = vsel %vm402, %v404, %v400
        %v406 = vmul.f32 1.0, %v405
        %v407 = vld [vmem:[%s293] sm:$0xff]
        %v408 = vmul.f32 %v406, %v407
        %vm409 = vcmask 64512
        %410 = vst.msk [vmem:[%s328] sm:$0xff] %vm409, %v408
        %s411 = sand.u32 %s152, 1
        %s412 = scalar_lea.sflag [#allocation4], %s411
        %s413 = sand.u32 %s152, 1
        %s414 = smul.addr %s413, 8
        %s415 = scalar_lea.vmem [#allocation10], %s414
        // Predicated region
        $region53: #{tpu_custom_call.1} parent=35 // pred_check
          %p416 = pneg %p162
        $region54: #{tpu_custom_call.1} parent=35 // pred_check_branch
          %418 = sbr.rel (%p416) target = $region56
        $region55: #{tpu_custom_call.1} parent=35 // pred_region
          %420 = vsyncadd %s412, 0
          %s421 = sadd.s32 %s32, %s31
          %s422 = smul.addr %s421, 8
          %s423 = scalar_lea.hbm %s4, %s422
          %s425 = sshll.u32 %s415, 4
          %s426 = int_to_ptr.vmem [resolvable:$true] %s425
          %s427 = sshll.u32 %s423, 4
          %s428 = int_to_ptr.hbm [resolvable:$true] %s427
          %430 = dma.vmem_to_hbm [thread:$0]  %s426, 128, %s428, %s412
        $region56: #{tpu_custom_call.1} parent=35 // pred_fallthru
          _
      $region36: #{tpu_custom_call.1} parent=5 // pred_fallthru
        _
      %p431 = scmp.le.s32.totalorder 2, %s22
      // Predicated region
      $region57: #{tpu_custom_call.1} parent=5 // pred_check
        %p432 = pneg %p431
      $region58: #{tpu_custom_call.1} parent=5 // pred_check_branch
        %434 = sbr.rel (%p432) target = $region60
      $region59: #{tpu_custom_call.1} parent=5 // pred_region
        %s435 = ssub.s32 %s22, 2
        // Predicated region
        $region61: #{tpu_custom_call.1} parent=59 // pred_check
          %p436 = pneg %p168
        $region62: #{tpu_custom_call.1} parent=59 // pred_check_branch
          %438 = sbr.rel (%p436) target = $region64
        $region63: #{tpu_custom_call.1} parent=59 // pred_region
          %s439 = sand.u32 %s153, 1
          %s440 = scalar_lea.sflag [#allocation4], %s439
          %s441 = sand.u32 %s153, 1
          %s442 = smul.addr %s441, 8
          %s443 = scalar_lea.vmem [#allocation10], %s442
          %445 = dma.done %s440, 128
        $region64: #{tpu_custom_call.1} parent=59 // pred_fallthru
          _
      $region60: #{tpu_custom_call.1} parent=5 // pred_fallthru
        _
    $region6: #{tpu_custom_call.1} parent=1 // loop_footer
      %s26 = sadd.s32 1, %s22
    $region7: #{tpu_custom_call.1} parent=1 // loop_footer_branch
      %21 = sbr.rel target = $region3
    $region8: #{tpu_custom_call.1} parent=1 // loop_exit
      _
    %446 = vsyncpa [#allocation3], 1
    %s447 = scalar_lea.sflag [#allocation3], 1
    %448 = vsyncpa %s447, 1
    %449 = vsyncpa [#allocation6], 1
    %s450 = scalar_lea.sflag [#allocation6], 1
    %451 = vsyncpa %s450, 1
    %452 = vsyncpa [#allocation9], 1
    %s453 = scalar_lea.sflag [#allocation9], 1
    %454 = vsyncpa %s453, 1
    %455 = vsyncpa [#allocation4], 1
    %s456 = scalar_lea.sflag [#allocation4], 1
    %457 = vsyncpa %s456, 1

</llo_original>
